<compile_context>
chip_gen: v7x
topology: tpu7x:2x2x1
jax: 0.10.0
libtpu: 0.0.40
codegen_flags: <defaults>
</compile_context>

<pallas_src>
import functools

import jax
import jax.numpy as jnp
from jax.experimental import pallas as pl
from jax.experimental.pallas import tpu as pltpu


def focal_loss_kernel(logits_ref, y_ref, alpha_ref, sum_ref, cnt_ref,
                      *, n_rows, row_tile, inner_steps):
    p = pl.program_id(0)   # parallel chunk axis
    i = pl.program_id(1)   # sequential reduction axis (output block is resident)

    @pl.when(i == 0)
    def _init():
        sum_ref[...] = jnp.zeros_like(sum_ref)
        cnt_ref[...] = jnp.zeros_like(cnt_ref)

    # Global row index of each sublane in this tile (derived from program ids,
    # NOT from data, so duplicated/partial tail blocks are masked correctly).
    block = p * inner_steps + i
    row0 = block * row_tile
    row_idx = row0 + jax.lax.broadcasted_iota(jnp.int32, (row_tile, 1), 0)
    row_valid = row_idx < n_rows                              # (TN, 1) bool

    logits = logits_ref[...].astype(jnp.float32)              # (TN, C)
    y = y_ref[...]                                            # (TN, 1) int32 (tail rows may be garbage)
    alpha = alpha_ref[...]                                    # (1, C) f32

    # Numerically stable row-wise log-softmax. Garbage tail rows may produce
    # NaN/Inf here; they are discarded by the final keep-mask select.
    m = jnp.max(logits, axis=-1, keepdims=True)
    lse = m + jnp.log(jnp.sum(jnp.exp(logits - m), axis=-1, keepdims=True))

    # Gather logit / alpha at the label position: one lane compare reused in
    # two selects (cheaper than a float one-hot + two multiplies).
    # (Labels >= C silently gather 0 instead of erroring like torch.gather.)
    lane = jax.lax.broadcasted_iota(jnp.int32, logits.shape, 1)
    is_y = lane == y                                          # (TN, C) bool
    logit_y = jnp.sum(jnp.where(is_y, logits, 0.0), axis=-1, keepdims=True)
    alpha_y = jnp.sum(jnp.where(is_y, alpha, 0.0), axis=-1, keepdims=True)

    log_pt = logit_y - lse                                    # (TN, 1)
    pt = jnp.exp(log_pt)
    ce = -alpha_y * log_pt                                    # weighted NLL, reduction='none'

    # Drop pad rows (label 0) and out-of-bounds tail rows in one select; this
    # also discards any NaN produced from garbage tail data.
    keep = jnp.logical_and(row_valid, y != 0)                 # (TN, 1) bool
    omp = 1.0 - pt
    contrib = jnp.where(keep, omp * omp * ce, 0.0)            # gamma = 2

    # Scalar (lane-dense) accumulation into the tiny resident output block.
    sum_ref[...] += jnp.sum(contrib, keepdims=True)[None]                      # (1,1,1)
    cnt_ref[...] += jnp.sum(keep.astype(jnp.float32), keepdims=True)[None]     # (1,1,1)


def _pick_row_tile(n_rows, n_classes, requested, itemsize):
    # VMEM budget per row of tile:
    #   * logits block, native dtype, double-buffered (lanes pad C to mult of 128)
    #   * labels block (row_tile, 1) int32 pads to 128 lanes, double-buffered
    #   * ~3 f32 tile-sized compute temporaries (logits f32 copy, exp, select)
    lane_c = ((max(n_classes, 128) + 127) // 128) * 128
    per_row = lane_c * itemsize * 2 + 128 * 4 * 2 + lane_c * 4 * 3
    budget_bytes = 40 * 1024 * 1024   # headroom under v7x's 64 MiB physical VMEM
    cap = max(8, (budget_bytes // per_row) // 8 * 8)
    rt = min(requested, cap, ((n_rows + 7) // 8) * 8)   # no point exceeding N
    return max(8, (rt // 8) * 8)


def focal_loss(y_pred, y, alpha, *, row_tile=2048, num_chunks=1):
    """y_pred: [N, C] logits (any float dtype); y: [N] int labels (0 = pad);
    alpha: [C] class weights.  num_chunks=2 is only useful on 2-TC chips (v7x)."""
    n, c = y_pred.shape
    row_tile = _pick_row_tile(n, c, row_tile, jnp.dtype(y_pred.dtype).itemsize)
    nblocks = -(-n // row_tile)                       # ceil(n / row_tile)
    n_par = max(1, min(num_chunks, nblocks))          # parallel chunks
    inner = -(-nblocks // n_par)                      # sequential steps per chunk

    labels = y.astype(jnp.int32).reshape(n, 1)        # (N, 1) — tiny copy only
    alpha2d = alpha.astype(jnp.float32).reshape(1, c) # (1, C)

    def row_block_map(p, i):
        # Clamp to a valid block; clamped/duplicated blocks are masked in-kernel
        # via the program-id-derived row index, so they contribute nothing.
        return (jnp.minimum(p * inner + i, nblocks - 1), 0)

    kernel = functools.partial(
        focal_loss_kernel, n_rows=n, row_tile=row_tile, inner_steps=inner)

    sum_part, cnt_part = pl.pallas_call(
        kernel,
        out_shape=(jax.ShapeDtypeStruct((n_par, 1, 1), jnp.float32),
                   jax.ShapeDtypeStruct((n_par, 1, 1), jnp.float32)),
        grid_spec=pltpu.PrefetchScalarGridSpec(
            num_scalar_prefetch=0,
            grid=(n_par, inner),
            in_specs=[
                pl.BlockSpec((row_tile, c), row_block_map),   # logits (native dtype)
                pl.BlockSpec((row_tile, 1), row_block_map),   # labels
                pl.BlockSpec((1, c), lambda p, i: (0, 0)),    # alpha (broadcast)
            ],
            out_specs=[
                pl.BlockSpec((1, 1, 1), lambda p, i: (p, 0, 0)),   # per-chunk sum
                pl.BlockSpec((1, 1, 1), lambda p, i: (p, 0, 0)),   # per-chunk count
            ],
        ),
        compiler_params=pltpu.CompilerParams(
            dimension_semantics=("parallel", "arbitrary"),
            vmem_limit_bytes=48 * 1024 * 1024),
    )(y_pred, labels, alpha2d)

    # Final mean over kept rows (NaN if every label is pad — matches reference).
    return jnp.sum(sum_part) / jnp.sum(cnt_part)


def focal_loss_ref(y_pred, y, alpha, gamma=2.0):
    """Pure-JAX reference mirroring the PyTorch forward."""
    keep = y != 0
    log_p = jax.nn.log_softmax(y_pred.astype(jnp.float32), axis=-1)
    log_pt = jnp.take_along_axis(log_p, y[:, None].astype(jnp.int32), axis=-1)[:, 0]
    pt = jnp.exp(log_pt)
    ce = -alpha[y] * log_pt
    per_row = (1.0 - pt) ** gamma * ce
    return jnp.sum(jnp.where(keep, per_row, 0.0)) / jnp.sum(keep)


if __name__ == "__main__":
    key = jax.random.PRNGKey(0)
    k1, k2, k3 = jax.random.split(key, 3)

    batch, seq, num_classes = 2, 8, 10
    n = batch * seq  # flattened (batch * seq) token rows, as the loss expects

    y_pred = jax.random.normal(k1, (n, num_classes), dtype=jnp.float32)
    y = jax.random.randint(k2, (n,), 0, num_classes, dtype=jnp.int32)  # label 0 == pad
    # deterministic synthetic class weights (the module's `weight_numpy`)
    alpha = jax.random.uniform(k3, (num_classes,), dtype=jnp.float32,
                               minval=0.5, maxval=1.5)

    loss = jax.block_until_ready(focal_loss(y_pred, y, alpha))
    ref = focal_loss_ref(y_pred, y, alpha)
    assert jnp.allclose(loss, ref, rtol=1e-5, atol=1e-5), (loss, ref)
    print("KERNEL_OK")
</pallas_src>

<mosaic_0001>
module attributes {stable_mosaic.version = 11 : i64} {
  func.func @focal_loss_kernel(%arg0: i32, %arg1: i32, %arg2: memref<16x10xf32, #tpu.memory_space<vmem>>, %arg3: memref<16x1xi32, #tpu.memory_space<vmem>>, %arg4: memref<1x10xf32, #tpu.memory_space<vmem>>, %arg5: memref<1x1x1xf32, #tpu.memory_space<vmem>>, %arg6: memref<1x1x1xf32, #tpu.memory_space<vmem>>) attributes {dimension_semantics = [#tpu.dimension_semantics<parallel>, #tpu.dimension_semantics<arbitrary>], iteration_bounds = array<i64: 1, 1>, scalar_prefetch = 0 : i64, scratch_operands = 0 : i64, tpu.core_type = #tpu.core_type<tc>, window_params = [{transform_indices = @transform_0, window_bounds = array<i64: 16, 10>}, {transform_indices = @transform_1, window_bounds = array<i64: 16, 1>}, {pipeline_mode = #tpu.pipeline_mode<synchronous>, transform_indices = @transform_2, window_bounds = array<i64: 1, 10>}, {transform_indices = @transform_3, window_bounds = array<i64: 1, 1, 1>}, {transform_indices = @transform_4, window_bounds = array<i64: 1, 1, 1>}]} {
    %c0_i32 = arith.constant 0 : i32
    %0 = arith.cmpi eq, %arg1, %c0_i32 : i32
    %1 = arith.extui %0 : i1 to i32
    %c0_i32_0 = arith.constant 0 : i32
    %2 = arith.cmpi ne, %1, %c0_i32_0 : i32
    scf.if %2 {
      %cst_30 = arith.constant 0.000000e+00 : f32
      %70 = vector.broadcast %cst_30 : f32 to vector<1x1x1xf32>
      %c0_31 = arith.constant 0 : index
      %c0_32 = arith.constant 0 : index
      %c0_33 = arith.constant 0 : index
      %71 = vector.load %arg5[%c0_31, %c0_32, %c0_33] : memref<1x1x1xf32, #tpu.memory_space<vmem>>, vector<1x1x1xf32>
      tpu.vector_store %arg5[%c0_31, %c0_32, %c0_33], %70 {strides = array<i32>} : memref<1x1x1xf32, #tpu.memory_space<vmem>>, vector<1x1x1xf32>,
      %cst_34 = arith.constant 0.000000e+00 : f32
      %72 = vector.broadcast %cst_34 : f32 to vector<1x1x1xf32>
      %c0_35 = arith.constant 0 : index
      %c0_36 = arith.constant 0 : index
      %c0_37 = arith.constant 0 : index
      %73 = vector.load %arg6[%c0_35, %c0_36, %c0_37] : memref<1x1x1xf32, #tpu.memory_space<vmem>>, vector<1x1x1xf32>
      tpu.vector_store %arg6[%c0_35, %c0_36, %c0_37], %72 {strides = array<i32>} : memref<1x1x1xf32, #tpu.memory_space<vmem>>, vector<1x1x1xf32>,
    } else {
    }
    %c1_i32 = arith.constant 1 : i32
    %3 = arith.muli %arg0, %c1_i32 : i32
    %4 = arith.addi %3, %arg1 : i32
    %c16_i32 = arith.constant 16 : i32
    %5 = arith.muli %4, %c16_i32 : i32
    %6 = tpu.iota {dimensions = array<i32: 0>} : vector<16x1xi32>
    %7 = vector.broadcast %5 : i32 to vector<16x1xi32>
    %8 = arith.addi %7, %6 : vector<16x1xi32>
    %c16_i32_1 = arith.constant 16 : i32
    %9 = vector.broadcast %c16_i32_1 : i32 to vector<16x1xi32>
    %10 = arith.cmpi slt, %8, %9 : vector<16x1xi32>
    %c0 = arith.constant 0 : index
    %c0_2 = arith.constant 0 : index
    %11 = vector.load %arg2[%c0, %c0_2] : memref<16x10xf32, #tpu.memory_space<vmem>>, vector<16x10xf32>
    %c0_3 = arith.constant 0 : index
    %c0_4 = arith.constant 0 : index
    %12 = vector.load %arg3[%c0_3, %c0_4] : memref<16x1xi32, #tpu.memory_space<vmem>>, vector<16x1xi32>
    %c0_5 = arith.constant 0 : index
    %c0_6 = arith.constant 0 : index
    %13 = vector.load %arg4[%c0_5, %c0_6] : memref<1x10xf32, #tpu.memory_space<vmem>>, vector<1x10xf32>
    %cst = arith.constant dense<0xFF800000> : vector<16xf32>
    %14 = vector.multi_reduction <maximumf>, %11, %cst [1] : vector<16x10xf32> to vector<16xf32>
    %15 = vector.shape_cast %14 : vector<16xf32> to vector<16x1xf32>
    %16 = vector.broadcast %15 : vector<16x1xf32> to vector<16x10xf32>
    %17 = arith.subf %11, %16 : vector<16x10xf32>
    %18 = math.exp %17 : vector<16x10xf32>
    %cst_7 = arith.constant dense<0.000000e+00> : vector<16xf32>
    %19 = vector.multi_reduction <add>, %18, %cst_7 [1] : vector<16x10xf32> to vector<16xf32>
    %20 = vector.shape_cast %19 : vector<16xf32> to vector<16x1xf32>
    %21 = math.log %20 : vector<16x1xf32>
    %22 = arith.addf %15, %21 : vector<16x1xf32>
    %23 = tpu.iota {dimensions = array<i32: 1>} : vector<16x10xi32>
    %24 = vector.broadcast %12 : vector<16x1xi32> to vector<16x10xi32>
    %25 = arith.cmpi eq, %23, %24 : vector<16x10xi32>
    %cst_8 = arith.constant 0.000000e+00 : f32
    %26 = vector.broadcast %cst_8 : f32 to vector<16x10xf32>
    %27 = arith.select %25, %11, %26 : vector<16x10xi1>, vector<16x10xf32>
    %cst_9 = arith.constant dense<0.000000e+00> : vector<16xf32>
    %28 = vector.multi_reduction <add>, %27, %cst_9 [1] : vector<16x10xf32> to vector<16xf32>
    %29 = vector.shape_cast %28 : vector<16xf32> to vector<16x1xf32>
    %cst_10 = arith.constant 0.000000e+00 : f32
    %30 = vector.shape_cast %13 : vector<1x10xf32> to vector<1x10xf32>
    %31 = vector.broadcast %30 : vector<1x10xf32> to vector<16x10xf32>
    %32 = vector.broadcast %cst_10 : f32 to vector<16x10xf32>
    %33 = arith.select %25, %31, %32 : vector<16x10xi1>, vector<16x10xf32>
    %cst_11 = arith.constant dense<0.000000e+00> : vector<16xf32>
    %34 = vector.multi_reduction <add>, %33, %cst_11 [1] : vector<16x10xf32> to vector<16xf32>
    %35 = vector.shape_cast %34 : vector<16xf32> to vector<16x1xf32>
    %36 = arith.subf %29, %22 : vector<16x1xf32>
    %37 = math.exp %36 : vector<16x1xf32>
    %cst_12 = arith.constant 0.000000e+00 : f32
    %38 = vector.broadcast %cst_12 : f32 to vector<16x1xf32>
    %39 = arith.subf %38, %35 : vector<16x1xf32>
    %40 = arith.mulf %39, %36 : vector<16x1xf32>
    %c0_i32_13 = arith.constant 0 : i32
    %41 = vector.broadcast %c0_i32_13 : i32 to vector<16x1xi32>
    %42 = arith.cmpi ne, %12, %41 : vector<16x1xi32>
    %43 = arith.andi %10, %42 : vector<16x1xi1>
    %cst_14 = arith.constant 1.000000e+00 : f32
    %44 = vector.broadcast %cst_14 : f32 to vector<16x1xf32>
    %45 = arith.subf %44, %37 : vector<16x1xf32>
    %46 = arith.mulf %45, %45 : vector<16x1xf32>
    %47 = arith.mulf %46, %40 : vector<16x1xf32>
    %cst_15 = arith.constant 0.000000e+00 : f32
    %48 = vector.broadcast %cst_15 : f32 to vector<16x1xf32>
    %49 = arith.select %43, %47, %48 : vector<16x1xi1>, vector<16x1xf32>
    %c0_16 = arith.constant 0 : index
    %c0_17 = arith.constant 0 : index
    %c0_18 = arith.constant 0 : index
    %50 = vector.load %arg5[%c0_16, %c0_17, %c0_18] : memref<1x1x1xf32, #tpu.memory_space<vmem>>, vector<1x1x1xf32>
    %51 = vector.shape_cast %49 : vector<16x1xf32> to vector<1x16x1xf32>
    %cst_19 = arith.constant dense<0.000000e+00> : vector<1xf32>
    %52 = vector.multi_reduction <add>, %51, %cst_19 [1, 2] : vector<1x16x1xf32> to vector<1xf32>
    %53 = vector.shape_cast %52 : vector<1xf32> to vector<1x1x1xf32>
    %54 = vector.extract %53[0, 0, 0] : f32 from vector<1x1x1xf32>
    %55 = vector.broadcast %54 : f32 to vector<1x1xf32>
    %56 = vector.shape_cast %55 : vector<1x1xf32> to vector<1x1x1xf32>
    %57 = arith.addf %50, %56 : vector<1x1x1xf32>
    %c0_20 = arith.constant 0 : index
    %c0_21 = arith.constant 0 : index
    %c0_22 = arith.constant 0 : index
    %58 = vector.load %arg5[%c0_20, %c0_21, %c0_22] : memref<1x1x1xf32, #tpu.memory_space<vmem>>, vector<1x1x1xf32>
    tpu.vector_store %arg5[%c0_20, %c0_21, %c0_22], %57 {strides = array<i32>} : memref<1x1x1xf32, #tpu.memory_space<vmem>>, vector<1x1x1xf32>,
    %c0_23 = arith.constant 0 : index
    %c0_24 = arith.constant 0 : index
    %c0_25 = arith.constant 0 : index
    %59 = vector.load %arg6[%c0_23, %c0_24, %c0_25] : memref<1x1x1xf32, #tpu.memory_space<vmem>>, vector<1x1x1xf32>
    %60 = arith.extui %43 : vector<16x1xi1> to vector<16x1xi32>
    %61 = arith.sitofp %60 : vector<16x1xi32> to vector<16x1xf32>
    %62 = vector.shape_cast %61 : vector<16x1xf32> to vector<1x16x1xf32>
    %cst_26 = arith.constant dense<0.000000e+00> : vector<1xf32>
    %63 = vector.multi_reduction <add>, %62, %cst_26 [1, 2] : vector<1x16x1xf32> to vector<1xf32>
    %64 = vector.shape_cast %63 : vector<1xf32> to vector<1x1x1xf32>
    %65 = vector.extract %64[0, 0, 0] : f32 from vector<1x1x1xf32>
    %66 = vector.broadcast %65 : f32 to vector<1x1xf32>
    %67 = vector.shape_cast %66 : vector<1x1xf32> to vector<1x1x1xf32>
    %68 = arith.addf %59, %67 : vector<1x1x1xf32>
    %c0_27 = arith.constant 0 : index
    %c0_28 = arith.constant 0 : index
    %c0_29 = arith.constant 0 : index
    %69 = vector.load %arg6[%c0_27, %c0_28, %c0_29] : memref<1x1x1xf32, #tpu.memory_space<vmem>>, vector<1x1x1xf32>
    tpu.vector_store %arg6[%c0_27, %c0_28, %c0_29], %68 {strides = array<i32>} : memref<1x1x1xf32, #tpu.memory_space<vmem>>, vector<1x1x1xf32>,
    return
  }
  func.func @transform_0(%arg0: i32, %arg1: i32) -> (i32, i32) {
    %c1_i32 = arith.constant 1 : i32
    %0 = arith.muli %arg0, %c1_i32 : i32
    %1 = arith.addi %0, %arg1 : i32
    %c0_i32 = arith.constant 0 : i32
    %2 = arith.minsi %1, %c0_i32 : i32
    %c0_i32_0 = arith.constant 0 : i32
    %c0_i32_1 = arith.constant 0 : i32
    return %2, %c0_i32_0 : i32, i32
  }
  func.func @transform_1(%arg0: i32, %arg1: i32) -> (i32, i32) {
    %c1_i32 = arith.constant 1 : i32
    %0 = arith.muli %arg0, %c1_i32 : i32
    %1 = arith.addi %0, %arg1 : i32
    %c0_i32 = arith.constant 0 : i32
    %2 = arith.minsi %1, %c0_i32 : i32
    %c0_i32_0 = arith.constant 0 : i32
    %c0_i32_1 = arith.constant 0 : i32
    return %2, %c0_i32_0 : i32, i32
  }
  func.func @transform_2(%arg0: i32, %arg1: i32) -> (i32, i32) {
    %c0_i32 = arith.constant 0 : i32
    %c0_i32_0 = arith.constant 0 : i32
    %c0_i32_1 = arith.constant 0 : i32
    return %c0_i32, %c0_i32_0 : i32, i32
  }
  func.func @transform_3(%arg0: i32, %arg1: i32) -> (i32, i32, i32) {
    %c0_i32 = arith.constant 0 : i32
    %c0_i32_0 = arith.constant 0 : i32
    %c0_i32_1 = arith.constant 0 : i32
    return %arg0, %c0_i32, %c0_i32_0 : i32, i32, i32
  }
  func.func @transform_4(%arg0: i32, %arg1: i32) -> (i32, i32, i32) {
    %c0_i32 = arith.constant 0 : i32
    %c0_i32_0 = arith.constant 0 : i32
    %c0_i32_1 = arith.constant 0 : i32
    return %arg0, %c0_i32, %c0_i32_0 : i32, i32, i32
  }
}

</mosaic_0001>

<llo_original>
// kernel: tpu_custom_call.1
$region0: #{tpu_custom_call.1}
  #allocation0 [shape = 'u32[]', space=smem, size = 0x4, offset = 0x4, fixed_abs, tag = 'smem constant byte address 0x4 - core index']
  #allocation1 [shape = 'u32[144,128]{1,0:T(1,128)}', space=vmem, size = 0x12000, scoped, tag = 'internal scratch']
  %s0 = inlined_call_operand.vmem [shape: f32[16,10], index: 0, kind: input, shape index: {}]
  %s1 = inlined_call_operand.vmem [shape: s32[16,1], index: 1, kind: input, shape index: {}]
  %s2 = inlined_call_operand.vmem [shape: f32[1,10], index: 2, kind: input, shape index: {}]
  %s3 = inlined_call_operand.hbm [shape: f32[1,1,1], index: 3, kind: output, shape index: {0}]
  %s4 = inlined_call_operand.hbm [shape: f32[1,1,1], index: 4, kind: output, shape index: {1}]
  %5 = xla_tuple %s3, %s4
  %s6 = sld [smem:[#allocation0]]
  $region34: #{tpu_custom_call.1} parent=0
    _
  %s8 = ssub.s32 1, %s6
  %s9 = scalar_select 0, %s8, %s6
  $region1: #{tpu_custom_call.1} parent=0
    #allocation2 [shape = 'u8[512]{0}', space=vmem, size = 0x400, scoped, tag = 'output window, operand 0, single buffered']
    #allocation3 [shape = 's32[1]{0}', space=sflag, size = 0x4, scoped, tag = 'scoped memory for tpu_custom_call.1']
    #allocation4 [shape = 'u8[512]{0}', space=vmem, size = 0x400, scoped, tag = 'output window, operand 1, single buffered']
    #allocation5 [shape = 's32[1]{0}', space=sflag, size = 0x4, scoped, tag = 'scoped memory for tpu_custom_call.1']
    %10 = vsyncpa [#allocation3], 0
    %11 = vsyncpa [#allocation5], 0
    // Predicated region
    $region2: #{tpu_custom_call.1} parent=1 // pred_check
      _
    $region3: #{tpu_custom_call.1} parent=1 // pred_check_branch
      %13 = sbr.rel (0) target = $region5
    $region4: #{tpu_custom_call.1} parent=1 // pred_region
      %s14 = sadd.s32 0, 0
      %p15 = scmp.lt.s32.totalorder %s14, 0
      %s16 = scalar_select %p15, %s14, 0
      %s17 = smul.u32 2, %s16
      %p18 = scmp.lt.s32.totalorder %s17, 1
      %s19 = scalar_select %p18, %s17, 1
      %s20 = smul.addr %s19, 8
      %s21 = scalar_lea.vmem %s0, %s20
      %s22 = sadd.s32 0, 0
      %p23 = scmp.lt.s32.totalorder %s22, 0
      %s24 = scalar_select %p23, %s22, 0
      %s25 = smul.u32 2, %s24
    $region5: #{tpu_custom_call.1} parent=1 // pred_fallthru
      _
    // Predicated region
    $region6: #{tpu_custom_call.1} parent=1 // pred_check
      _
    $region7: #{tpu_custom_call.1} parent=1 // pred_check_branch
      %27 = sbr.rel (0) target = $region9
    $region8: #{tpu_custom_call.1} parent=1 // pred_region
      %s28 = sadd.s32 0, 0
      %p29 = scmp.lt.s32.totalorder %s28, 0
      %s30 = scalar_select %p29, %s28, 0
      %s31 = smul.u32 2, %s30
      %p32 = scmp.lt.s32.totalorder %s31, 1
      %s33 = scalar_select %p32, %s31, 1
      %s34 = smul.addr %s33, 8
      %s35 = scalar_lea.vmem %s1, %s34
      %s36 = sadd.s32 0, 0
      %p37 = scmp.lt.s32.totalorder %s36, 0
      %s38 = scalar_select %p37, %s36, 0
      %s39 = smul.u32 2, %s38
    $region9: #{tpu_custom_call.1} parent=1 // pred_fallthru
      _
    // Predicated region
    $region10: #{tpu_custom_call.1} parent=1 // pred_check
      _
    $region11: #{tpu_custom_call.1} parent=1 // pred_check_branch
      %41 = sbr.rel (0) target = $region13
    $region12: #{tpu_custom_call.1} parent=1 // pred_region
      _
    $region13: #{tpu_custom_call.1} parent=1 // pred_fallthru
      _
    %s42 = sadd.s32 0, 0
    %p43 = scmp.lt.s32.totalorder %s42, 0
    %s44 = scalar_select %p43, %s42, 0
    %s45 = smul.u32 2, %s44
    %p46 = scmp.lt.s32.totalorder %s45, 1
    %s47 = scalar_select %p46, %s45, 1
    %s48 = smul.addr %s47, 8
    %s49 = scalar_lea.vmem %s0, %s48
    %s50 = sadd.s32 0, 0
    %p51 = scmp.lt.s32.totalorder %s50, 0
    %s52 = scalar_select %p51, %s50, 0
    %s53 = smul.u32 2, %s52
    %p54 = scmp.lt.s32.totalorder %s53, 1
    %s55 = scalar_select %p54, %s53, 1
    %s56 = smul.addr %s55, 8
    %s57 = scalar_lea.vmem %s1, %s56
    %s58 = sadd.s32 0, 0
    %p59 = scmp.lt.s32.totalorder %s58, 0
    %s60 = scalar_select %p59, %s58, 0
    %s61 = smul.u32 2, %s60
    %p62 = scmp.lt.s32.totalorder %s61, 1
    %s63 = scalar_select %p62, %s61, 1
    %s64 = smul.addr %s63, 8
    %s65 = scalar_lea.vmem %s0, %s64
    %s66 = sadd.s32 0, 0
    %p67 = scmp.lt.s32.totalorder %s66, 0
    %s68 = scalar_select %p67, %s66, 0
    %s69 = smul.u32 2, %s68
    %s70 = sadd.s32 0, 0
    %p71 = scmp.lt.s32.totalorder %s70, 0
    %s72 = scalar_select %p71, %s70, 0
    %s73 = smul.u32 2, %s72
    %p74 = scmp.lt.s32.totalorder %s73, 1
    %s75 = scalar_select %p74, %s73, 1
    %s76 = smul.addr %s75, 8
    %s77 = scalar_lea.vmem %s1, %s76
    %s78 = sadd.s32 0, 0
    %p79 = scmp.lt.s32.totalorder %s78, 0
    %s80 = scalar_select %p79, %s78, 0
    %s81 = smul.u32 2, %s80
    %p82 = scmp.eq.s32.totalorder 0, 0
    // Predicated region
    $region14: #{tpu_custom_call.1} parent=1 // pred_check
      %p83 = pneg %p82
    $region15: #{tpu_custom_call.1} parent=1 // pred_check_branch
      %85 = sbr.rel (%p83) target = $region17
    $region16: #{tpu_custom_call.1} parent=1 // pred_region
      %vm86 = vcmask 0
      %87 = vst.msk [vmem:[#allocation2] sm:$0x1] %vm86, 0.0
      %88 = vst.msk [vmem:[#allocation4] sm:$0x1] %vm86, 0.0
    $region17: #{tpu_custom_call.1} parent=1 // pred_fallthru
      _
    %s89 = sadd.s32 0, 0
    %s90 = smul.u32 %s89, 16
    %v91 = vlaneseq
    %v92 = vshrl.u32 %v91, 7
    %v93 = vadd.s32 %v92, 8
    %v94 = vstv %s90
    %v95 = vadd.s32 %v94, %v92
    %v96 = vadd.s32 %v94, %v93
    %vm97 = vcmp.lt.s32.totalorder %v95, 16
    %vm98 = vcmp.lt.s32.totalorder %v96, 16
    %v99 = vld [vmem:[%s65] sm:$0xff]
    %v100 = vld [vmem:[%s65 + $0x8] sm:$0xff]
    %v101 = vld [vmem:[%s77] sm:$0xff]
    %v102 = vld [vmem:[%s77 + $0x8] sm:$0xff]
    %v103 = vld [vmem:[%s2] sm:$0x1]
    %vm104 = vcmask 80896
    %v105 = vsel %vm104, %v99, -inf
    %106 = vmax.xlane.f32.xlu0 %v105
    %v107 = vpop.xlane.xlu0 %106
    %v108 = vsel %vm104, %v100, -inf
    %109 = vmax.xlane.f32.xlu0 %v108
    %v110 = vpop.xlane.xlu0 %109
    %v111 = vsub.f32 %v99, %v107
    %v112 = vsub.f32 %v100, %v110
    %v113 = vmul.f32 %v111, 1.442695
    %v114 = vpow.pop %v113
    %v115 = vmul.f32 %v112, 1.442695
    %v116 = vpow.pop %v115
    %v117 = vsel %vm104, %v114, 0.0
    %118 = vadd.xlane.f32.xlu0 %v117
    %v119 = vpop.xlane.xlu0 %118
    %v120 = vsel %vm104, %v116, 0.0
    %121 = vadd.xlane.f32.xlu0 %v120
    %v122 = vpop.xlane.xlu0 %121
    %v123 = vlog2.pop %v119
    %v124 = vmul.f32 %v123, 0.6931472
    %v125 = vlog2.pop %v122
    %v126 = vmul.f32 %v125, 0.6931472
    %v127 = vadd.f32 %v107, %v124
    %v128 = vadd.f32 %v110, %v126
    %v129 = vlaneseq
    %v130 = vand.u32 %v129, 127
    %131 = vset.pattern.permute.xlu0 0
    %132 = vperm.xlu0 %131, %v101
    %v133 = vpop.permute.xlu0 %132
    %134 = vset.pattern.permute.xlu0 0
    %135 = vperm.xlu0 %134, %v102
    %v136 = vpop.permute.xlu0 %135
    %vm137 = vcmp.eq.s32.totalorder %v130, %v133
    %vm138 = vcmp.eq.s32.totalorder %v130, %v136
    %v139 = vsel %vm137, %v99, 0.0
    %v140 = vsel %vm138, %v100, 0.0
    %v141 = vsel %vm104, %v139, 0.0
    %142 = vadd.xlane.f32.xlu0 %v141
    %v143 = vpop.xlane.xlu0 %142
    %v144 = vsel %vm104, %v140, 0.0
    %145 = vadd.xlane.f32.xlu0 %v144
    %v146 = vpop.xlane.xlu0 %145
    %v148 = vlaneseq
    %v149 = vshrl.u32 %v148, 7
    %v150 = vsub.s32 0, %v149
    %v151 = vrot.slane %v103, %v150
    %v153 = vsel %vm137, %v151, 0.0
    %v154 = vsel %vm138, %v151, 0.0
    %v155 = vsel %vm104, %v153, 0.0
    %156 = vadd.xlane.f32.xlu0 %v155
    %v157 = vpop.xlane.xlu0 %156
    %v158 = vsel %vm104, %v154, 0.0
    %159 = vadd.xlane.f32.xlu0 %v158
    %v160 = vpop.xlane.xlu0 %159
    %v161 = vsub.f32 %v143, %v127
    %v162 = vsub.f32 %v146, %v128
    %v163 = vmul.f32 %v161, 1.442695
    %v164 = vpow.pop %v163
    %v165 = vmul.f32 %v162, 1.442695
    %v166 = vpow.pop %v165
    %v167 = vsub.f32 0.0, %v157
    %v168 = vsub.f32 0.0, %v160
    %v169 = vmul.f32 %v167, %v161
    %v170 = vmul.f32 %v168, %v162
    %vm171 = vcmp.ne.s32.totalorder %v101, 0
    %vm172 = vcmp.ne.s32.totalorder %v102, 0
    %vm173 = vmand %vm97, %vm171
    %vm174 = vmand %vm98, %vm172
    %v175 = vsub.f32 1.0, %v164
    %v176 = vsub.f32 1.0, %v166
    %v177 = vmul.f32 %v175, %v175
    %v178 = vmul.f32 %v176, %v176
    %v179 = vmul.f32 %v177, %v169
    %v180 = vmul.f32 %v178, %v170
    %v181 = vsel %vm173, %v179, 0.0
    %v182 = vsel %vm174, %v180, 0.0
    %v183 = vld [vmem:[#allocation2] sm:$0x1]
    %vm184 = vcmask 7168
    %v185 = vsel %vm184, %v181, 0.0
    %v186 = vsel %vm184, %v182, 0.0
    %v187 = vadd.f32 %v185, %v186
    %188 = vadd.xlane.f32.xlu0 %v187
    %v189 = vpop.xlane.xlu0 %188
    %v190 = vrot.slane %v189, 4
    %v191 = vadd.f32 %v189, %v190
    %v192 = vrot.slane %v191, 2
    %v193 = vadd.f32 %v191, %v192
    %v194 = vrot.slane %v193, 1
    %v195 = vadd.f32 %v193, %v194
    %s196 = vtos %v195
    %v197 = vstv %s196
    %v198 = vadd.f32 %v183, %v197
    %vm199 = vcmask 0
    %200 = vst.msk [vmem:[#allocation2] sm:$0x1] %vm199, %v198
    %v201 = vld [vmem:[#allocation4] sm:$0x1]
    %v202 = vsel %vm173, 1, 0
    %v203 = vsel %vm174, 1, 0
    %v204 = vcvt.s32.f32 %v202
    %v205 = vcvt.s32.f32 %v203
    %v206 = vsel %vm184, %v204, 0.0
    %v207 = vsel %vm184, %v205, 0.0
    %v208 = vadd.f32 %v206, %v207
    %209 = vadd.xlane.f32.xlu0 %v208
    %v210 = vpop.xlane.xlu0 %209
    %v211 = vrot.slane %v210, 4
    %v212 = vadd.f32 %v210, %v211
    %v213 = vrot.slane %v212, 2
    %v214 = vadd.f32 %v212, %v213
    %v215 = vrot.slane %v214, 1
    %v216 = vadd.f32 %v214, %v215
    %s217 = vtos %v216
    %v218 = vstv %s217
    %v219 = vadd.f32 %v201, %v218
    %220 = vst.msk [vmem:[#allocation4] sm:$0x1] %vm199, %v219
    // Predicated region
    $region18: #{tpu_custom_call.1} parent=1 // pred_check
      _
    $region19: #{tpu_custom_call.1} parent=1 // pred_check_branch
      %222 = sbr.rel (0) target = $region21
    $region20: #{tpu_custom_call.1} parent=1 // pred_region
      %s224 = ssub.s32 16, 16
      %225 = vsyncadd [#allocation3], %s224
      %s227 = sshll.u32 [#allocation2], 4
      %s228 = int_to_ptr.vmem [resolvable:$true] %s227
      %230 = dma.vmem_to_hbm [thread:$0]  %s228, 16, %s3, [#allocation3]
    $region21: #{tpu_custom_call.1} parent=1 // pred_fallthru
      _
    // Predicated region
    $region22: #{tpu_custom_call.1} parent=1 // pred_check
      _
    $region23: #{tpu_custom_call.1} parent=1 // pred_check_branch
      %232 = sbr.rel (0) target = $region25
    $region24: #{tpu_custom_call.1} parent=1 // pred_region
      %s234 = ssub.s32 16, 16
      %235 = vsyncadd [#allocation5], %s234
      %s237 = sshll.u32 [#allocation4], 4
      %s238 = int_to_ptr.vmem [resolvable:$true] %s237
      %240 = dma.vmem_to_hbm [thread:$0]  %s238, 16, %s4, [#allocation5]
    $region25: #{tpu_custom_call.1} parent=1 // pred_fallthru
      _
    // Predicated region
    $region26: #{tpu_custom_call.1} parent=1 // pred_check
      _
    $region27: #{tpu_custom_call.1} parent=1 // pred_check_branch
      %242 = sbr.rel (0) target = $region29
    $region28: #{tpu_custom_call.1} parent=1 // pred_region
      %243 = dma.done [#allocation3], 16
    $region29: #{tpu_custom_call.1} parent=1 // pred_fallthru
      _
    // Predicated region
    $region30: #{tpu_custom_call.1} parent=1 // pred_check
      _
    $region31: #{tpu_custom_call.1} parent=1 // pred_check_branch
      %245 = sbr.rel (0) target = $region33
    $region32: #{tpu_custom_call.1} parent=1 // pred_region
      %246 = dma.done [#allocation5], 16
    $region33: #{tpu_custom_call.1} parent=1 // pred_fallthru
      _
    %247 = vsyncpa [#allocation3], 1
    %248 = vsyncpa [#allocation5], 1

</llo_original>
